<compile_context>
chip_gen: v7x
topology: tpu7x:2x2x1
jax: 0.10.0
libtpu: 0.0.40
codegen_flags: <defaults>
</compile_context>

<pallas_src>
import functools

import jax
import jax.numpy as jnp
from jax.experimental import pallas as pl
from jax.experimental.pallas import tpu as pltpu


def _round_up(x, m):
    return (x + m - 1) // m * m


def _pick_row_tile(H, W, requested=None, target_rows=256):
    """Largest TH that divides H and keeps TH*W (accumulator rows) bounded."""
    cap = requested if requested is not None else max(1, target_rows // max(W, 1))
    cap = max(1, min(cap, H))
    th = 1
    for cand in range(1, cap + 1):
        if H % cand == 0:
            th = cand
    return th


def _conv_bn_relu_kernel(x_ref, w_ref, scale_ref, shift_ref, o_ref, *, TH, W, CINP, COUTP):
    # x_ref:     (1, 1, TH+2, W+2, CINP)  zero-padded input row tile (incl. halo), bf16
    # w_ref:     (3, 3*CINP, COUTP)       conv weights, dy-major, (dx, cin) fused into K
    # scale_ref: (1, COUTP) f32           gamma / sqrt(var + eps)
    # shift_ref: (1, COUTP) f32           (conv_bias - mean) * scale + beta
    # o_ref:     (1, TH, W, COUTP) f32
    x = x_ref[0, 0]                                   # (TH+2, W+2, CINP)

    acc = jnp.zeros((TH * W, COUTP), dtype=jnp.float32)
    # 3 MXU contractions (K = 3*CINP) instead of 9 tiny K=CINP matmuls.
    for dy in range(3):
        slab = x[dy:dy + TH]                          # (TH, W+2, CINP) — aligned slice
        patch = jnp.concatenate(                      # fuse the 3 dx taps into K
            [slab[:, 0:W, :], slab[:, 1:W + 1, :], slab[:, 2:W + 2, :]],
            axis=-1)                                  # (TH, W, 3*CINP)
        acc = acc + jnp.dot(patch.reshape(TH * W, 3 * CINP), w_ref[dy],
                            preferred_element_type=jnp.float32)

    out = acc * scale_ref[0] + shift_ref[0]           # fused conv-bias + BatchNorm (f32)
    out = jnp.maximum(out, 0.0)                       # ReLU
    o_ref[0] = out.reshape(TH, W, COUTP).astype(o_ref.dtype)


def conv3x3_block_x1(x_nchw, conv_w, conv_b, bn_gamma, bn_beta, bn_mean, bn_var,
                     eps=1e-5, row_tile=None, compute_dtype=jnp.bfloat16):
    """Forward pass of (Conv2d 3x3 pad=1 => BatchNorm2d => ReLU), NCHW in/out."""
    N, Cin, H, W = x_nchw.shape
    Cout = conv_w.shape[0]

    CINP = _round_up(Cin, 8)        # sublane-friendly contraction packing
    COUTP = _round_up(Cout, 128)    # lane-dense output tile
    TH = _pick_row_tile(H, W, row_tile)
    T = H // TH

    # ---- Input: NCHW -> NHWC, zero-pad (spatial +1, channels to CINP), then
    # overlapping row tiles (halo rows included).  All of this fuses with the
    # mandatory layout transpose into one XLA producer.
    x = jnp.transpose(x_nchw, (0, 2, 3, 1))                        # (N, H, W, Cin)
    x = jnp.pad(x, ((0, 0), (1, 1), (1, 1), (0, CINP - Cin)))      # (N, H+2, W+2, CINP)
    x = x.astype(compute_dtype)
    x_tiles = jnp.stack([x[:, t * TH: t * TH + TH + 2] for t in range(T)], axis=1)
    # x_tiles: (N, T, TH+2, W+2, CINP)

    # ---- Weights: (Cout, Cin, 3, 3) -> (3, 3*CINP, COUTP); dy-major, (dx, cin)
    # collapsed into the contraction dim to match the fused-tap patch.
    w = jnp.transpose(conv_w, (2, 3, 1, 0))                        # (3, 3, Cin, Cout)
    w = jnp.pad(w, ((0, 0), (0, 0), (0, CINP - Cin), (0, COUTP - Cout)))
    w = w.reshape(3, 3 * CINP, COUTP).astype(compute_dtype)

    # ---- Fold conv bias + BatchNorm (running stats) into per-channel scale/shift.
    scale = (bn_gamma / jnp.sqrt(bn_var + eps)).astype(jnp.float32)        # (Cout,)
    shift = ((conv_b - bn_mean) * scale + bn_beta).astype(jnp.float32)     # (Cout,)
    scale = jnp.pad(scale, (0, COUTP - Cout)).reshape(1, COUTP)
    shift = jnp.pad(shift, (0, COUTP - Cout)).reshape(1, COUTP)

    kernel = functools.partial(_conv_bn_relu_kernel, TH=TH, W=W, CINP=CINP, COUTP=COUTP)

    out_nhwc = pl.pallas_call(
        kernel,
        out_shape=jax.ShapeDtypeStruct((N, H, W, COUTP), jnp.float32),
        grid_spec=pltpu.PrefetchScalarGridSpec(
            num_scalar_prefetch=0,
            grid=(N, T),
            in_specs=[
                pl.BlockSpec((1, 1, TH + 2, W + 2, CINP), lambda n, t: (n, t, 0, 0, 0)),
                pl.BlockSpec((3, 3 * CINP, COUTP), lambda n, t: (0, 0, 0)),
                pl.BlockSpec((1, COUTP), lambda n, t: (0, 0)),
                pl.BlockSpec((1, COUTP), lambda n, t: (0, 0)),
            ],
            out_specs=pl.BlockSpec((1, TH, W, COUTP), lambda n, t: (n, t, 0, 0)),
        ),
        compiler_params=pltpu.CompilerParams(
            dimension_semantics=("parallel", "parallel")),
        # NOTE: per-step footprint is small by construction; for very large
        # tiles raise pltpu.CompilerParams(vmem_limit_bytes=...) here.
    )(x_tiles, w, scale, shift)

    # Drop Cout padding, NHWC -> NCHW (single fused XLA op).
    return jnp.transpose(out_nhwc[..., :Cout], (0, 3, 1, 2))


def _reference(x_nchw, conv_w, conv_b, bn_gamma, bn_beta, bn_mean, bn_var, eps=1e-5):
    # Pure-JAX f32 reference (NCHW), inference-mode BatchNorm.
    y = jax.lax.conv_general_dilated(
        x_nchw, conv_w, window_strides=(1, 1), padding=((1, 1), (1, 1)),
        dimension_numbers=("NCHW", "OIHW", "NCHW"))
    y = y + conv_b[None, :, None, None]
    y = (y - bn_mean[None, :, None, None]) / jnp.sqrt(bn_var[None, :, None, None] + eps)
    y = y * bn_gamma[None, :, None, None] + bn_beta[None, :, None, None]
    return jnp.maximum(y, 0.0)


if __name__ == "__main__":
    key = jax.random.PRNGKey(0)
    k_x, k_w, k_b, k_g, k_be, k_m, k_v = jax.random.split(key, 7)

    N, Cin, H, W = 2, 4, 16, 16
    Cout = 8

    x = jax.random.normal(k_x, (N, Cin, H, W), dtype=jnp.float32)
    conv_w = jax.random.normal(k_w, (Cout, Cin, 3, 3), dtype=jnp.float32) * 0.1
    conv_b = jax.random.normal(k_b, (Cout,), dtype=jnp.float32) * 0.1
    bn_gamma = 1.0 + 0.1 * jax.random.normal(k_g, (Cout,), dtype=jnp.float32)
    bn_beta = 0.1 * jax.random.normal(k_be, (Cout,), dtype=jnp.float32)
    bn_mean = 0.1 * jax.random.normal(k_m, (Cout,), dtype=jnp.float32)
    bn_var = 1.0 + 0.1 * jax.random.uniform(k_v, (Cout,), dtype=jnp.float32)

    ref = _reference(x, conv_w, conv_b, bn_gamma, bn_beta, bn_mean, bn_var)

    fwd = jax.jit(conv3x3_block_x1,
                  static_argnames=("eps", "row_tile", "compute_dtype"))

    # row_tile=8 exercises the multi-tile halo path (grid=(N, 2));
    # row_tile=None auto-picks the tile (single row tile at this small size).
    for rt in (8, None):
        out = fwd(x, conv_w, conv_b, bn_gamma, bn_beta, bn_mean, bn_var, row_tile=rt)
        out = jax.block_until_ready(out)
        assert out.shape == (N, Cout, H, W)
        # bf16 matmul inputs with f32 accumulation -> loosened tolerance.
        assert jnp.allclose(out, ref, atol=5e-2, rtol=5e-2), (
            "max abs err = %f" % float(jnp.max(jnp.abs(out - ref))))

    print("KERNEL_OK")
</pallas_src>

<mosaic_0001>
module attributes {stable_mosaic.version = 11 : i64} {
  func.func @_conv_bn_relu_kernel(%arg0: i32, %arg1: i32, %arg2: memref<1x1x10x18x8xbf16, #tpu.memory_space<vmem>>, %arg3: memref<3x24x128xbf16, #tpu.memory_space<vmem>>, %arg4: memref<1x128xf32, #tpu.memory_space<vmem>>, %arg5: memref<1x128xf32, #tpu.memory_space<vmem>>, %arg6: memref<1x8x16x128xf32, #tpu.memory_space<vmem>>) attributes {dimension_semantics = [#tpu.dimension_semantics<parallel>, #tpu.dimension_semantics<parallel>], iteration_bounds = array<i64: 2, 2>, scalar_prefetch = 0 : i64, scratch_operands = 0 : i64, tpu.core_type = #tpu.core_type<tc>, window_params = [{transform_indices = @transform_0, window_bounds = array<i64: 1, 1, 10, 18, 8>}, {pipeline_mode = #tpu.pipeline_mode<synchronous>, transform_indices = @transform_1, window_bounds = array<i64: 3, 24, 128>}, {pipeline_mode = #tpu.pipeline_mode<synchronous>, transform_indices = @transform_2, window_bounds = array<i64: 1, 128>}, {pipeline_mode = #tpu.pipeline_mode<synchronous>, transform_indices = @transform_3, window_bounds = array<i64: 1, 128>}, {transform_indices = @transform_4, window_bounds = array<i64: 1, 8, 16, 128>}]} {
    %c0 = arith.constant 0 : index
    %c0_0 = arith.constant 0 : index
    %c0_1 = arith.constant 0 : index
    %c0_2 = arith.constant 0 : index
    %c0_3 = arith.constant 0 : index
    %0 = vector.load %arg2[%c0, %c0_0, %c0_1, %c0_2, %c0_3] : memref<1x1x10x18x8xbf16, #tpu.memory_space<vmem>>, vector<1x1x10x18x8xbf16>
    %1 = vector.shape_cast %0 : vector<1x1x10x18x8xbf16> to vector<10x18x8xbf16>
    %cst = arith.constant 0.000000e+00 : f32
    %2 = vector.broadcast %cst : f32 to vector<128x128xf32>
    %3 = vector.extract_strided_slice %1 {offsets = [0, 0, 0], sizes = [8, 18, 8], strides = [1, 1, 1]} : vector<10x18x8xbf16> to vector<8x18x8xbf16>
    %4 = vector.extract_strided_slice %3 {offsets = [0, 0, 0], sizes = [8, 16, 8], strides = [1, 1, 1]} : vector<8x18x8xbf16> to vector<8x16x8xbf16>
    %5 = vector.extract_strided_slice %3 {offsets = [0, 1, 0], sizes = [8, 16, 8], strides = [1, 1, 1]} : vector<8x18x8xbf16> to vector<8x16x8xbf16>
    %6 = vector.extract_strided_slice %3 {offsets = [0, 2, 0], sizes = [8, 16, 8], strides = [1, 1, 1]} : vector<8x18x8xbf16> to vector<8x16x8xbf16>
    %7 = tpu.concatenate %4, %5, %6 in 2 : vector<8x16x8xbf16>, vector<8x16x8xbf16>, vector<8x16x8xbf16> -> vector<8x16x24xbf16>
    %8 = vector.shape_cast %7 : vector<8x16x24xbf16> to vector<128x24xbf16>
    %c0_4 = arith.constant 0 : index
    %c0_5 = arith.constant 0 : index
    %c0_6 = arith.constant 0 : index
    %9 = vector.load %arg3[%c0_4, %c0_5, %c0_6] : memref<3x24x128xbf16, #tpu.memory_space<vmem>>, vector<1x24x128xbf16>
    %10 = vector.shape_cast %9 : vector<1x24x128xbf16> to vector<24x128xbf16>
    %cst_7 = arith.constant dense<0.000000e+00> : vector<128x128xf32>
    %11 = tpu.matmul %8, %10, %cst_7 {dimension_numbers = #tpu.dot_dimension_numbers<[1], [0], [0], [1], [0, 0, 1, 1], [], []>} : vector<128x24xbf16>, vector<24x128xbf16>, vector<128x128xf32> -> vector<128x128xf32>
    %12 = arith.addf %2, %11 : vector<128x128xf32>
    %13 = vector.extract_strided_slice %1 {offsets = [1, 0, 0], sizes = [8, 18, 8], strides = [1, 1, 1]} : vector<10x18x8xbf16> to vector<8x18x8xbf16>
    %14 = vector.extract_strided_slice %13 {offsets = [0, 0, 0], sizes = [8, 16, 8], strides = [1, 1, 1]} : vector<8x18x8xbf16> to vector<8x16x8xbf16>
    %15 = vector.extract_strided_slice %13 {offsets = [0, 1, 0], sizes = [8, 16, 8], strides = [1, 1, 1]} : vector<8x18x8xbf16> to vector<8x16x8xbf16>
    %16 = vector.extract_strided_slice %13 {offsets = [0, 2, 0], sizes = [8, 16, 8], strides = [1, 1, 1]} : vector<8x18x8xbf16> to vector<8x16x8xbf16>
    %17 = tpu.concatenate %14, %15, %16 in 2 : vector<8x16x8xbf16>, vector<8x16x8xbf16>, vector<8x16x8xbf16> -> vector<8x16x24xbf16>
    %18 = vector.shape_cast %17 : vector<8x16x24xbf16> to vector<128x24xbf16>
    %c1 = arith.constant 1 : index
    %c0_8 = arith.constant 0 : index
    %c0_9 = arith.constant 0 : index
    %19 = vector.load %arg3[%c1, %c0_8, %c0_9] : memref<3x24x128xbf16, #tpu.memory_space<vmem>>, vector<1x24x128xbf16>
    %20 = vector.shape_cast %19 : vector<1x24x128xbf16> to vector<24x128xbf16>
    %cst_10 = arith.constant dense<0.000000e+00> : vector<128x128xf32>
    %21 = tpu.matmul %18, %20, %cst_10 {dimension_numbers = #tpu.dot_dimension_numbers<[1], [0], [0], [1], [0, 0, 1, 1], [], []>} : vector<128x24xbf16>, vector<24x128xbf16>, vector<128x128xf32> -> vector<128x128xf32>
    %22 = arith.addf %12, %21 : vector<128x128xf32>
    %23 = vector.extract_strided_slice %1 {offsets = [2, 0, 0], sizes = [8, 18, 8], strides = [1, 1, 1]} : vector<10x18x8xbf16> to vector<8x18x8xbf16>
    %24 = vector.extract_strided_slice %23 {offsets = [0, 0, 0], sizes = [8, 16, 8], strides = [1, 1, 1]} : vector<8x18x8xbf16> to vector<8x16x8xbf16>
    %25 = vector.extract_strided_slice %23 {offsets = [0, 1, 0], sizes = [8, 16, 8], strides = [1, 1, 1]} : vector<8x18x8xbf16> to vector<8x16x8xbf16>
    %26 = vector.extract_strided_slice %23 {offsets = [0, 2, 0], sizes = [8, 16, 8], strides = [1, 1, 1]} : vector<8x18x8xbf16> to vector<8x16x8xbf16>
    %27 = tpu.concatenate %24, %25, %26 in 2 : vector<8x16x8xbf16>, vector<8x16x8xbf16>, vector<8x16x8xbf16> -> vector<8x16x24xbf16>
    %28 = vector.shape_cast %27 : vector<8x16x24xbf16> to vector<128x24xbf16>
    %c2 = arith.constant 2 : index
    %c0_11 = arith.constant 0 : index
    %c0_12 = arith.constant 0 : index
    %29 = vector.load %arg3[%c2, %c0_11, %c0_12] : memref<3x24x128xbf16, #tpu.memory_space<vmem>>, vector<1x24x128xbf16>
    %30 = vector.shape_cast %29 : vector<1x24x128xbf16> to vector<24x128xbf16>
    %cst_13 = arith.constant dense<0.000000e+00> : vector<128x128xf32>
    %31 = tpu.matmul %28, %30, %cst_13 {dimension_numbers = #tpu.dot_dimension_numbers<[1], [0], [0], [1], [0, 0, 1, 1], [], []>} : vector<128x24xbf16>, vector<24x128xbf16>, vector<128x128xf32> -> vector<128x128xf32>
    %32 = arith.addf %22, %31 : vector<128x128xf32>
    %c0_14 = arith.constant 0 : index
    %c0_15 = arith.constant 0 : index
    %33 = vector.load %arg4[%c0_14, %c0_15] : memref<1x128xf32, #tpu.memory_space<vmem>>, vector<1x128xf32>
    %34 = vector.shape_cast %33 : vector<1x128xf32> to vector<128xf32>
    %35 = vector.shape_cast %34 : vector<128xf32> to vector<1x128xf32>
    %36 = vector.broadcast %35 : vector<1x128xf32> to vector<128x128xf32>
    %37 = arith.mulf %32, %36 : vector<128x128xf32>
    %c0_16 = arith.constant 0 : index
    %c0_17 = arith.constant 0 : index
    %38 = vector.load %arg5[%c0_16, %c0_17] : memref<1x128xf32, #tpu.memory_space<vmem>>, vector<1x128xf32>
    %39 = vector.shape_cast %38 : vector<1x128xf32> to vector<128xf32>
    %40 = vector.shape_cast %39 : vector<128xf32> to vector<1x128xf32>
    %41 = vector.broadcast %40 : vector<1x128xf32> to vector<128x128xf32>
    %42 = arith.addf %37, %41 : vector<128x128xf32>
    %cst_18 = arith.constant 0.000000e+00 : f32
    %43 = vector.broadcast %cst_18 : f32 to vector<128x128xf32>
    %44 = arith.maximumf %42, %43 : vector<128x128xf32>
    %45 = vector.shape_cast %44 : vector<128x128xf32> to vector<8x16x128xf32>
    %c0_19 = arith.constant 0 : index
    %c0_20 = arith.constant 0 : index
    %c0_21 = arith.constant 0 : index
    %c0_22 = arith.constant 0 : index
    %46 = vector.load %arg6[%c0_19, %c0_20, %c0_21, %c0_22] : memref<1x8x16x128xf32, #tpu.memory_space<vmem>>, vector<1x8x16x128xf32>
    %47 = vector.shape_cast %46 : vector<1x8x16x128xf32> to vector<8x16x128xf32>
    %48 = vector.shape_cast %45 : vector<8x16x128xf32> to vector<1x8x16x128xf32>
    tpu.vector_store %arg6[%c0_19, %c0_20, %c0_21, %c0_22], %48 {strides = array<i32>} : memref<1x8x16x128xf32, #tpu.memory_space<vmem>>, vector<1x8x16x128xf32>,
    return
  }
  func.func @transform_0(%arg0: i32, %arg1: i32) -> (i32, i32, i32, i32, i32) {
    %c0_i32 = arith.constant 0 : i32
    %c0_i32_0 = arith.constant 0 : i32
    %c0_i32_1 = arith.constant 0 : i32
    %c0_i32_2 = arith.constant 0 : i32
    return %arg0, %arg1, %c0_i32, %c0_i32_0, %c0_i32_1 : i32, i32, i32, i32, i32
  }
  func.func @transform_1(%arg0: i32, %arg1: i32) -> (i32, i32, i32) {
    %c0_i32 = arith.constant 0 : i32
    %c0_i32_0 = arith.constant 0 : i32
    %c0_i32_1 = arith.constant 0 : i32
    %c0_i32_2 = arith.constant 0 : i32
    return %c0_i32, %c0_i32_0, %c0_i32_1 : i32, i32, i32
  }
  func.func @transform_2(%arg0: i32, %arg1: i32) -> (i32, i32) {
    %c0_i32 = arith.constant 0 : i32
    %c0_i32_0 = arith.constant 0 : i32
    %c0_i32_1 = arith.constant 0 : i32
    return %c0_i32, %c0_i32_0 : i32, i32
  }
  func.func @transform_3(%arg0: i32, %arg1: i32) -> (i32, i32) {
    %c0_i32 = arith.constant 0 : i32
    %c0_i32_0 = arith.constant 0 : i32
    %c0_i32_1 = arith.constant 0 : i32
    return %c0_i32, %c0_i32_0 : i32, i32
  }
  func.func @transform_4(%arg0: i32, %arg1: i32) -> (i32, i32, i32, i32) {
    %c0_i32 = arith.constant 0 : i32
    %c0_i32_0 = arith.constant 0 : i32
    %c0_i32_1 = arith.constant 0 : i32
    return %arg0, %arg1, %c0_i32, %c0_i32_0 : i32, i32, i32, i32
  }
}

</mosaic_0001>

<llo_original>
// kernel: conv3x3_block_x1.1
$region0: #{conv3x3_block_x1.1}
  #allocation0 [shape = 'u32[]', space=smem, size = 0x4, offset = 0x4, fixed_abs, tag = 'smem constant byte address 0x4 - core index']
  #allocation1 [shape = 'u32[144,128]{1,0:T(1,128)}', space=vmem, size = 0x12000, scoped, tag = 'internal scratch']
  %s0 = inlined_call_operand.vmem [shape: bf16[2,2,10,18,8], index: 0, kind: input, shape index: {}]
  %s1 = inlined_call_operand.vmem [shape: bf16[3,24,128], index: 1, kind: input, shape index: {}]
  %s2 = inlined_call_operand.vmem [shape: f32[1,128], index: 2, kind: input, shape index: {}]
  %s3 = inlined_call_operand.vmem [shape: f32[1,128], index: 3, kind: input, shape index: {}]
  %s4 = inlined_call_operand.vmem [shape: f32[2,16,16,128], index: 4, kind: output, shape index: {}]
  %s5 = sld [smem:[#allocation0]]
  $region49: #{conv3x3_block_x1.1} parent=0
    _
  %s7 = ssub.s32 1, %s5
  %s8 = scalar_select 0, %s7, %s5
  loop: start=0, step=1, limit=6
  $region2: #{conv3x3_block_x1.1} parent=0 // loop_pre_header
    _
  $region3: #{conv3x3_block_x1.1} parent=0 // loop_header
    %s10 = sphi 0, %s14
    %p11 = scmp.ge.s32.totalorder %s10, 6
    %s17 = sphi 0, %s29
    %s18 = sphi 0, %s25
    %s19 = sphi 0, %s17
    %s20 = sphi 0, %s18
    %s21 = sphi 0, %s19
    %s22 = sphi 0, %s20
    %s34 = sphi 0, %s36
    %s37 = sphi 0, %s34
    %s38 = sphi 0, %s37
    %s54 = sphi 0, %s38
    %s58 = sphi 0, %s58
    %s60 = sphi 0, %s58
    %s61 = sphi 0, %s60
    %s75 = sphi 0, %s61
    %s79 = sphi 0, %s79
    %s81 = sphi 0, %s79
    %s82 = sphi 0, %s81
    %s96 = sphi 0, %s82
    %s100 = sphi 0, %s100
    %s102 = sphi 0, %s100
    %s103 = sphi 0, %s102
    %s117 = sphi 0, %s103
    %s125 = sphi 0, %s127
    %s128 = sphi 0, %s125
    %s129 = sphi 0, %s128
    %s145 = sphi 0, %s129
  $region4: #{conv3x3_block_x1.1} parent=0 // loop_header_branch
    %13 = sbr.rel (%p11) target = $region8
  $region5: #{conv3x3_block_x1.1} parent=0 // loop_body
    %s15 = ssub.s32 %s10, 1
    %s16 = ssub.s32 %s10, 2
    %s23 = sadd.s32 1, %s18
    %p24 = scmp.ge.s32.totalorder %s23, 2
    %s25 = scalar_select %p24, 0, %s23
    %s26 = sadd.s32 1, %s17
    %s27 = scalar_select %p24, %s26, %s17
    %p28 = scmp.ge.s32.totalorder %s27, 2
    %s29 = scalar_select %p28, 0, %s27
    %s30 = ssub.s32 %s17, %s29
    %s31 = ssub.s32 %s18, %s25
    %s32 = sor.u32 %s30, %s31
    %p33 = scmp.eq.s32.totalorder %s32, 0
    %s35 = sadd.s32 %s34, 1
    %s36 = scalar_select %p33, %s34, %s35
    %p39 = pneg %p33
    %p40 = scmp.eq.s32.totalorder %s10, 3
    %p41 = por %p39, %p40
    %p42 = scmp.ne.s32.totalorder %s34, %s37
    %p43 = scmp.eq.s32.totalorder %s10, 0
    %p44 = por %p42, %p43
    %p45 = scmp.ne.s32.totalorder %s34, %s37
    %p46 = scmp.eq.s32.totalorder %s15, 3
    %p47 = por %p45, %p46
    %p48 = scmp.ne.s32.totalorder %s37, %s38
    %p49 = scmp.eq.s32.totalorder %s15, 0
    %p50 = por %p48, %p49
    %p51 = scmp.ne.s32.totalorder %s37, %s38
    %p52 = scmp.eq.s32.totalorder %s16, 3
    %p53 = por %p51, %p52
    %p55 = scmp.ne.s32.totalorder %s38, %s54
    %p56 = scmp.eq.s32.totalorder %s16, 0
    %p57 = por %p55, %p56
    %s59 = sadd.s32 %s58, 1
    %p62 = scmp.eq.s32.totalorder %s10, 3
    %p63 = scmp.ne.s32.totalorder %s58, %s60
    %p64 = scmp.eq.s32.totalorder %s10, 0
    %p65 = por %p63, %p64
    %p66 = scmp.ne.s32.totalorder %s58, %s60
    %p67 = scmp.eq.s32.totalorder %s15, 3
    %p68 = por %p66, %p67
    %p69 = scmp.ne.s32.totalorder %s60, %s61
    %p70 = scmp.eq.s32.totalorder %s15, 0
    %p71 = por %p69, %p70
    %p72 = scmp.ne.s32.totalorder %s60, %s61
    %p73 = scmp.eq.s32.totalorder %s16, 3
    %p74 = por %p72, %p73
    %p76 = scmp.ne.s32.totalorder %s61, %s75
    %p77 = scmp.eq.s32.totalorder %s16, 0
    %p78 = por %p76, %p77
    %s80 = sadd.s32 %s79, 1
    %p83 = scmp.eq.s32.totalorder %s10, 3
    %p84 = scmp.ne.s32.totalorder %s79, %s81
    %p85 = scmp.eq.s32.totalorder %s10, 0
    %p86 = por %p84, %p85
    %p87 = scmp.ne.s32.totalorder %s79, %s81
    %p88 = scmp.eq.s32.totalorder %s15, 3
    %p89 = por %p87, %p88
    %p90 = scmp.ne.s32.totalorder %s81, %s82
    %p91 = scmp.eq.s32.totalorder %s15, 0
    %p92 = por %p90, %p91
    %p93 = scmp.ne.s32.totalorder %s81, %s82
    %p94 = scmp.eq.s32.totalorder %s16, 3
    %p95 = por %p93, %p94
    %p97 = scmp.ne.s32.totalorder %s82, %s96
    %p98 = scmp.eq.s32.totalorder %s16, 0
    %p99 = por %p97, %p98
    %s101 = sadd.s32 %s100, 1
    %p104 = scmp.eq.s32.totalorder %s10, 3
    %p105 = scmp.ne.s32.totalorder %s100, %s102
    %p106 = scmp.eq.s32.totalorder %s10, 0
    %p107 = por %p105, %p106
    %p108 = scmp.ne.s32.totalorder %s100, %s102
    %p109 = scmp.eq.s32.totalorder %s15, 3
    %p110 = por %p108, %p109
    %p111 = scmp.ne.s32.totalorder %s102, %s103
    %p112 = scmp.eq.s32.totalorder %s15, 0
    %p113 = por %p111, %p112
    %p114 = scmp.ne.s32.totalorder %s102, %s103
    %p115 = scmp.eq.s32.totalorder %s16, 3
    %p116 = por %p114, %p115
    %p118 = scmp.ne.s32.totalorder %s103, %s117
    %p119 = scmp.eq.s32.totalorder %s16, 0
    %p120 = por %p118, %p119
    %s121 = ssub.s32 %s17, %s29
    %s122 = ssub.s32 %s18, %s25
    %s123 = sor.u32 %s121, %s122
    %p124 = scmp.eq.s32.totalorder %s123, 0
    %s126 = sadd.s32 %s125, 1
    %s127 = scalar_select %p124, %s125, %s126
    %p130 = pneg %p124
    %p131 = scmp.eq.s32.totalorder %s10, 3
    %p132 = por %p130, %p131
    %p133 = scmp.ne.s32.totalorder %s125, %s128
    %p134 = scmp.eq.s32.totalorder %s10, 0
    %p135 = por %p133, %p134
    %p136 = scmp.ne.s32.totalorder %s125, %s128
    %p137 = scmp.eq.s32.totalorder %s15, 3
    %p138 = por %p136, %p137
    %p139 = scmp.ne.s32.totalorder %s128, %s129
    %p140 = scmp.eq.s32.totalorder %s15, 0
    %p141 = por %p139, %p140
    %p142 = scmp.ne.s32.totalorder %s128, %s129
    %p143 = scmp.eq.s32.totalorder %s16, 3
    %p144 = por %p142, %p143
    %p146 = scmp.ne.s32.totalorder %s129, %s145
    %p147 = scmp.eq.s32.totalorder %s16, 0
    %p148 = por %p146, %p147
    %p149 = scmp.le.s32.totalorder 1, %s10
    %p150 = scmp.lt.s32.totalorder %s10, 5
    %p151 = pnand %p149, %p150
    %p152 = pneg %p151
    // Predicated region
    $region9: #{conv3x3_block_x1.1} parent=5 // pred_check
      _
    $region10: #{conv3x3_block_x1.1} parent=5 // pred_check_branch
      %154 = sbr.rel (%p151) target = $region12
    $region11: #{conv3x3_block_x1.1} parent=5 // pred_region
      %s155 = ssub.s32 %s10, 1
      // Predicated region
      $region13: #{conv3x3_block_x1.1} parent=11 // pred_check
        %p156 = pneg %p71
      $region14: #{conv3x3_block_x1.1} parent=11 // pred_check_branch
        %158 = sbr.rel (%p156) target = $region16
      $region15: #{conv3x3_block_x1.1} parent=11 // pred_region
        _
      $region16: #{conv3x3_block_x1.1} parent=11 // pred_fallthru
        _
      // Predicated region
      $region17: #{conv3x3_block_x1.1} parent=11 // pred_check
        %p159 = pneg %p92
      $region18: #{conv3x3_block_x1.1} parent=11 // pred_check_branch
        %161 = sbr.rel (%p159) target = $region20
      $region19: #{conv3x3_block_x1.1} parent=11 // pred_region
        _
      $region20: #{conv3x3_block_x1.1} parent=11 // pred_fallthru
        _
      // Predicated region
      $region21: #{conv3x3_block_x1.1} parent=11 // pred_check
        %p162 = pneg %p113
      $region22: #{conv3x3_block_x1.1} parent=11 // pred_check_branch
        %164 = sbr.rel (%p162) target = $region24
      $region23: #{conv3x3_block_x1.1} parent=11 // pred_region
        _
      $region24: #{conv3x3_block_x1.1} parent=11 // pred_fallthru
        _
    $region12: #{conv3x3_block_x1.1} parent=5 // pred_fallthru
      _
    %p165 = scmp.lt.s32.totalorder %s10, 4
    // Predicated region
    $region25: #{conv3x3_block_x1.1} parent=5 // pred_check
      %p166 = pneg %p165
    $region26: #{conv3x3_block_x1.1} parent=5 // pred_check_branch
      %168 = sbr.rel (%p166) target = $region28
    $region27: #{conv3x3_block_x1.1} parent=5 // pred_region
      // Predicated region
      $region29: #{conv3x3_block_x1.1} parent=27 // pred_check
        %p169 = pneg %p44
      $region30: #{conv3x3_block_x1.1} parent=27 // pred_check_branch
        %171 = sbr.rel (%p169) target = $region32
      $region31: #{conv3x3_block_x1.1} parent=27 // pred_region
        %p172 = scmp.lt.s32.totalorder %s17, 1
        %s173 = scalar_select %p172, %s17, 1
        %p174 = scmp.lt.s32.totalorder %s18, 1
        %s175 = scalar_select %p174, %s18, 1
        %s176 = smul.addr %s175, 30
        %s177 = smul.addr %s173, 60
        %s178 = sadd.s32 %s176, %s177
        %s179 = smul.addr %s178, 4
        %s180 = scalar_lea.vmem %s0, %s179
      $region32: #{conv3x3_block_x1.1} parent=27 // pred_fallthru
        _
    $region28: #{conv3x3_block_x1.1} parent=5 // pred_fallthru
      _
    %p181 = scmp.le.s32.totalorder 1, %s10
    %p182 = scmp.lt.s32.totalorder %s10, 5
    %p183 = pnand %p181, %p182
    %p184 = pneg %p183
    // Predicated region
    $region33: #{conv3x3_block_x1.1} parent=5 // pred_check
      _
    $region34: #{conv3x3_block_x1.1} parent=5 // pred_check_branch
      %186 = sbr.rel (%p183) target = $region36
    $region35: #{conv3x3_block_x1.1} parent=5 // pred_region
      %s187 = ssub.s32 %s10, 1
      %p188 = scmp.lt.s32.totalorder %s19, 1
      %s189 = scalar_select %p188, %s19, 1
      %p190 = scmp.lt.s32.totalorder %s20, 1
      %s191 = scalar_select %p190, %s20, 1
      %s192 = smul.addr %s191, 30
      %s193 = smul.addr %s189, 60
      %s194 = sadd.s32 %s192, %s193
      %s195 = smul.addr %s194, 4
      %s196 = scalar_lea.vmem %s0, %s195
      %p197 = pneg %p50
      %p198 = pneg %p47
      %p199 = pneg %p71
      %p200 = pneg %p68
      %p201 = pneg %p92
      %p202 = pneg %p89
      %p203 = pneg %p113
      %p204 = pneg %p110
      %p205 = pneg %p141
      %p206 = pneg %p138
      %s207 = smul.u32 8, %s20
      %p208 = scmp.lt.s32.totalorder %s19, 1
      %s209 = scalar_select %p208, %s19, 1
      %p210 = scmp.lt.s32.totalorder %s207, 15
      %s211 = scalar_select %p210, %s207, 15
      %s212 = smul.addr %s211, 2
      %s213 = smul.addr %s209, 32
      %s214 = sadd.s32 %s212, %s213
      %s215 = smul.addr %s214, 8
      %s216 = scalar_lea.vmem %s4, %s215
      %p217 = scmp.lt.s32.totalorder %s19, 1
      %s218 = scalar_select %p217, %s19, 1
      %p219 = scmp.lt.s32.totalorder %s20, 1
      %s220 = scalar_select %p219, %s20, 1
      %s221 = smul.addr %s220, 30
      %s222 = smul.addr %s218, 60
      %s223 = sadd.s32 %s221, %s222
      %s224 = smul.addr %s223, 4
      %s225 = scalar_lea.vmem %s0, %s224
      %s226 = smul.u32 8, %s20
      %p227 = scmp.lt.s32.totalorder %s19, 1
      %s228 = scalar_select %p227, %s19, 1
      %p229 = scmp.lt.s32.totalorder %s226, 15
      %s230 = scalar_select %p229, %s226, 15
      %s231 = smul.addr %s230, 2
      %s232 = smul.addr %s228, 32
      %s233 = sadd.s32 %s231, %s232
      %s234 = smul.addr %s233, 8
      %s235 = scalar_lea.vmem %s4, %s234
      %s236 = smul.u32 8, %s20
      %v238 = vld [vmem:[%s225] sm:$0xf]
      %v239 = vld [vmem:[%s225 + $0x4] sm:$0xf]
      %v240 = vld [vmem:[%s225 + $0x8] sm:$0x1]
      %v241 = vld [vmem:[%s225 + $0xc] sm:$0xf]
      %v242 = vld [vmem:[%s225 + $0x10] sm:$0xf]
      %v243 = vld [vmem:[%s225 + $0x14] sm:$0x1]
      %v244 = vld [vmem:[%s225 + $0x18] sm:$0xf]
      %v245 = vld [vmem:[%s225 + $0x1c] sm:$0xf]
      %v246 = vld [vmem:[%s225 + $0x20] sm:$0x1]
      %v247 = vld [vmem:[%s225 + $0x24] sm:$0xf]
      %v248 = vld [vmem:[%s225 + $0x28] sm:$0xf]
      %v249 = vld [vmem:[%s225 + $0x2c] sm:$0x1]
      %v250 = vld [vmem:[%s225 + $0x30] sm:$0xf]
      %v251 = vld [vmem:[%s225 + $0x34] sm:$0xf]
      %v252 = vld [vmem:[%s225 + $0x38] sm:$0x1]
      %v253 = vld [vmem:[%s225 + $0x3c] sm:$0xf]
      %v254 = vld [vmem:[%s225 + $0x40] sm:$0xf]
      %v255 = vld [vmem:[%s225 + $0x44] sm:$0x1]
      %v256 = vld [vmem:[%s225 + $0x48] sm:$0xf]
      %v257 = vld [vmem:[%s225 + $0x4c] sm:$0xf]
      %v258 = vld [vmem:[%s225 + $0x50] sm:$0x1]
      %v259 = vld [vmem:[%s225 + $0x54] sm:$0xf]
      %v260 = vld [vmem:[%s225 + $0x58] sm:$0xf]
      %v261 = vld [vmem:[%s225 + $0x5c] sm:$0x1]
      %v262 = vld [vmem:[%s225 + $0x60] sm:$0xf]
      %v263 = vld [vmem:[%s225 + $0x64] sm:$0xf]
      %v264 = vld [vmem:[%s225 + $0x68] sm:$0x1]
      %v265 = vld [vmem:[%s225 + $0x6c] sm:$0xf]
      %v266 = vld [vmem:[%s225 + $0x70] sm:$0xf]
      %v267 = vld [vmem:[%s225 + $0x74] sm:$0x1]
      %v284 = vunpack.c.l.b16 %v238
      %v285 = vunpack.c.l.b16 %v239
      %v286 = vunpack.c.l.b16 %v241
      %v287 = vunpack.c.l.b16 %v242
      %v288 = vunpack.c.l.b16 %v244
      %v289 = vunpack.c.l.b16 %v245
      %v290 = vunpack.c.l.b16 %v247
      %v291 = vunpack.c.l.b16 %v248
      %v292 = vunpack.c.l.b16 %v250
      %v293 = vunpack.c.l.b16 %v251
      %v294 = vunpack.c.l.b16 %v253
      %v295 = vunpack.c.l.b16 %v254
      %v296 = vunpack.c.l.b16 %v256
      %v297 = vunpack.c.l.b16 %v257
      %v298 = vunpack.c.l.b16 %v259
      %v299 = vunpack.c.l.b16 %v260
      %v300 = vpack.c.b16 %v285, %v284
      %v301 = vpack.c.b16 %v287, %v286
      %v302 = vpack.c.b16 %v289, %v288
      %v303 = vpack.c.b16 %v291, %v290
      %v304 = vpack.c.b16 %v293, %v292
      %v305 = vpack.c.b16 %v295, %v294
      %v306 = vpack.c.b16 %v297, %v296
      %v307 = vpack.c.b16 %v299, %v298
      %v316 = vunpack.c.l.b16 %v240
      %v317 = vunpack.c.l.b16 %v243
      %v318 = vunpack.c.l.b16 %v246
      %v319 = vunpack.c.l.b16 %v249
      %v320 = vunpack.c.l.b16 %v252
      %v321 = vunpack.c.l.b16 %v255
      %v322 = vunpack.c.l.b16 %v258
      %v323 = vunpack.c.l.b16 %v261
      %v324 = vpack.c.b16 %v316, %v316
      %v325 = vpack.c.b16 %v317, %v317
      %v326 = vpack.c.b16 %v318, %v318
      %v327 = vpack.c.b16 %v319, %v319
      %v328 = vpack.c.b16 %v320, %v320
      %v329 = vpack.c.b16 %v321, %v321
      %v330 = vpack.c.b16 %v322, %v322
      %v331 = vpack.c.b16 %v323, %v323
      %vm332 = vsmask.f32 7424
      %v334 = vshrl.u32 %v300, 16
      %v336 = vshll.u32 %v300, 16
      %v338 = vrot.slane %v336, 1
      %v339 = vor.u32 %v334, %v338
      %v341 = vshll.u32 %v324, 16
      %v343 = vrot.slane %v341, 1
      %v344 = vsel %vm332, %v339, %v343
      %v346 = vshrl.u32 %v301, 16
      %v348 = vshll.u32 %v301, 16
      %v350 = vrot.slane %v348, 1
      %v351 = vor.u32 %v346, %v350
      %v353 = vshll.u32 %v325, 16
      %v355 = vrot.slane %v353, 1
      %v356 = vsel %vm332, %v351, %v355
      %v358 = vshrl.u32 %v302, 16
      %v360 = vshll.u32 %v302, 16
      %v362 = vrot.slane %v360, 1
      %v363 = vor.u32 %v358, %v362
      %v365 = vshll.u32 %v326, 16
      %v367 = vrot.slane %v365, 1
      %v368 = vsel %vm332, %v363, %v367
      %v370 = vshrl.u32 %v303, 16
      %v372 = vshll.u32 %v303, 16
      %v374 = vrot.slane %v372, 1
      %v375 = vor.u32 %v370, %v374
      %v377 = vshll.u32 %v327, 16
      %v379 = vrot.slane %v377, 1
      %v380 = vsel %vm332, %v375, %v379
      %v382 = vshrl.u32 %v304, 16
      %v384 = vshll.u32 %v304, 16
      %v386 = vrot.slane %v384, 1
      %v387 = vor.u32 %v382, %v386
      %v389 = vshll.u32 %v328, 16
      %v391 = vrot.slane %v389, 1
      %v392 = vsel %vm332, %v387, %v391
      %v394 = vshrl.u32 %v305, 16
      %v396 = vshll.u32 %v305, 16
      %v398 = vrot.slane %v396, 1
      %v399 = vor.u32 %v394, %v398
      %v401 = vshll.u32 %v329, 16
      %v403 = vrot.slane %v401, 1
      %v404 = vsel %vm332, %v399, %v403
      %v406 = vshrl.u32 %v306, 16
      %v408 = vshll.u32 %v306, 16
      %v410 = vrot.slane %v408, 1
      %v411 = vor.u32 %v406, %v410
      %v413 = vshll.u32 %v330, 16
      %v415 = vrot.slane %v413, 1
      %v416 = vsel %vm332, %v411, %v415
      %v418 = vshrl.u32 %v307, 16
      %v420 = vshll.u32 %v307, 16
      %v422 = vrot.slane %v420, 1
      %v423 = vor.u32 %v418, %v422
      %v425 = vshll.u32 %v331, 16
      %v427 = vrot.slane %v425, 1
      %v428 = vsel %vm332, %v423, %v427
      %429 = vrot.lane.b32.xlu0 %v344, 8
      %v430 = vpop.permute.xlu0 %429
      %431 = vrot.lane.b32.xlu0 %v356, 8
      %v432 = vpop.permute.xlu0 %431
      %433 = vrot.lane.b32.xlu0 %v368, 8
      %v434 = vpop.permute.xlu0 %433
      %435 = vrot.lane.b32.xlu0 %v380, 8
      %v436 = vpop.permute.xlu0 %435
      %437 = vrot.lane.b32.xlu0 %v392, 8
      %v438 = vpop.permute.xlu0 %437
      %439 = vrot.lane.b32.xlu0 %v404, 8
      %v440 = vpop.permute.xlu0 %439
      %441 = vrot.lane.b32.xlu0 %v416, 8
      %v442 = vpop.permute.xlu0 %441
      %443 = vrot.lane.b32.xlu0 %v428, 8
      %v444 = vpop.permute.xlu0 %443
      %vm445 = vcmask 1046528
      %v446 = vrot.slane %v300, 1
      %v447 = vrot.slane %v324, 1
      %v448 = vsel %vm445, %v446, %v447
      %v449 = vrot.slane %v301, 1
      %v450 = vrot.slane %v325, 1
      %v451 = vsel %vm445, %v449, %v450
      %v452 = vrot.slane %v302, 1
      %v453 = vrot.slane %v326, 1
      %v454 = vsel %vm445, %v452, %v453
      %v455 = vrot.slane %v303, 1
      %v456 = vrot.slane %v327, 1
      %v457 = vsel %vm445, %v455, %v456
      %v458 = vrot.slane %v304, 1
      %v459 = vrot.slane %v328, 1
      %v460 = vsel %vm445, %v458, %v459
      %v461 = vrot.slane %v305, 1
      %v462 = vrot.slane %v329, 1
      %v463 = vsel %vm445, %v461, %v462
      %v464 = vrot.slane %v306, 1
      %v465 = vrot.slane %v330, 1
      %v466 = vsel %vm445, %v464, %v465
      %v467 = vrot.slane %v307, 1
      %v468 = vrot.slane %v331, 1
      %v469 = vsel %vm445, %v467, %v468
      %470 = vrot.lane.b32.xlu0 %v448, 16
      %v471 = vpop.permute.xlu0 %470
      %472 = vrot.lane.b32.xlu0 %v451, 16
      %v473 = vpop.permute.xlu0 %472
      %474 = vrot.lane.b32.xlu0 %v454, 16
      %v475 = vpop.permute.xlu0 %474
      %476 = vrot.lane.b32.xlu0 %v457, 16
      %v477 = vpop.permute.xlu0 %476
      %478 = vrot.lane.b32.xlu0 %v460, 16
      %v479 = vpop.permute.xlu0 %478
      %480 = vrot.lane.b32.xlu0 %v463, 16
      %v481 = vpop.permute.xlu0 %480
      %482 = vrot.lane.b32.xlu0 %v466, 16
      %v483 = vpop.permute.xlu0 %482
      %484 = vrot.lane.b32.xlu0 %v469, 16
      %v485 = vpop.permute.xlu0 %484
      %vm486 = vcmask 64512
      %v488 = vsel %vm486, %v300, %v430
      %v490 = vsel %vm486, %v301, %v432
      %v492 = vsel %vm486, %v302, %v434
      %v494 = vsel %vm486, %v303, %v436
      %v496 = vsel %vm486, %v304, %v438
      %v498 = vsel %vm486, %v305, %v440
      %v500 = vsel %vm486, %v306, %v442
      %v502 = vsel %vm486, %v307, %v444
      %vm503 = vcmask 130048
      %v505 = vsel %vm503, %v488, %v471
      %v507 = vsel %vm503, %v490, %v473
      %v509 = vsel %vm503, %v492, %v475
      %v511 = vsel %vm503, %v494, %v477
      %v513 = vsel %vm503, %v496, %v479
      %v515 = vsel %vm503, %v498, %v481
      %v517 = vsel %vm503, %v500, %v483
      %v519 = vsel %vm503, %v502, %v485
      %v520 = vld [vmem:[%s1] sm:$0xf]
      %v521 = vld [vmem:[%s1 + $0x4] sm:$0xf]
      %v522 = vld [vmem:[%s1 + $0x8] sm:$0xf]
      %v525 = vunpack.c.l.b16 %v262
      %v526 = vunpack.c.l.b16 %v263
      %v527 = vpack.c.b16 %v526, %v525
      %v529 = vunpack.c.l.b16 %v264
      %v530 = vpack.c.b16 %v529, %v529
      %v532 = vshrl.u32 %v527, 16
      %v534 = vshll.u32 %v527, 16
      %v536 = vrot.slane %v534, 1
      %v537 = vor.u32 %v532, %v536
      %v539 = vshll.u32 %v530, 16
      %v541 = vrot.slane %v539, 1
      %v542 = vsel %vm332, %v537, %v541
      %543 = vrot.lane.b32.xlu0 %v542, 8
      %v544 = vpop.permute.xlu0 %543
      %v545 = vrot.slane %v527, 1
      %v546 = vrot.slane %v530, 1
      %v547 = vsel %vm445, %v545, %v546
      %548 = vrot.lane.b32.xlu0 %v547, 16
      %v549 = vpop.permute.xlu0 %548
      %v551 = vsel %vm486, %v527, %v544
      %v553 = vsel %vm503, %v551, %v549
      %s554 = scalar_lea.vmem %s1, 12
      %v555 = vld [vmem:[%s554] sm:$0xf]
      %v556 = vld [vmem:[%s554 + $0x4] sm:$0xf]
      %v557 = vld [vmem:[%s554 + $0x8] sm:$0xf]
      %v561 = vunpack.c.l.b16 %v555
      %v562 = vunpack.c.l.b16 %v556
      %v563 = vunpack.c.l.b16 %v557
      %v564 = vpack.c.b16 %v562, %v561
      %v565 = vpack.c.b16 %v563, %v563
      %vm567 = vcmask 195584
      %v568 = vsel %vm567, %v507, 0
      %v570 = vsel %vm567, %v509, 0
      %v572 = vsel %vm567, %v511, 0
      %v574 = vsel %vm567, %v513, 0
      %v576 = vsel %vm567, %v515, 0
      %v578 = vsel %vm567, %v517, 0
      %v580 = vsel %vm567, %v519, 0
      %v582 = vsel %vm567, %v553, 0
      %vm584 = vcmask 1043456
      %v586 = vsel %vm584, %v565, 0
      %588 = vmatprep.subr.bf16.mxu0 0
      %589 = vmatpush1.bf16.msra.mxu0 %v564
      %590 = vmatprep.subr.bf16.mxu0 0
      %591 = vmatpush1.bf16.msra.mxu0 %v586
      %592 = vmatprep.subr.bf16.mxu0 0
      %593 = vmatpush1.bf16.msra.mxu0 0
      %594 = vmatprep.subr.bf16.mxu0 0
      %595 = vmatpush1.bf16.msra.mxu0 0
      %596 = vmatprep.subr.bf16.mxu0 0
      %597 = vmatpush1.bf16.msra.mxu0 0
      %598 = vmatprep.subr.bf16.mxu0 0
      %599 = vmatpush1.bf16.msra.mxu0 0
      %600 = vmatprep.subr.bf16.mxu0 0
      %601 = vmatpush1.bf16.msra.mxu0 0
      %602 = vmatprep.subr.bf16.mxu0 0
      %603 = vmatpush1.bf16.msra.mxu0 0
      %604 = vmatprep.subr.bf16.mxu0 0
      %605 = vmatpush1.bf16.msra.mxu0 0
      %606 = vmatprep.subr.bf16.mxu0 0
      %607 = vmatpush1.bf16.msra.mxu0 0
      %608 = vmatprep.subr.bf16.mxu0 0
      %609 = vmatpush1.bf16.msra.mxu0 0
      %610 = vmatprep.subr.bf16.mxu0 0
      %611 = vmatpush1.bf16.msra.mxu0 0
      %612 = vmatprep.subr.bf16.mxu0 0
      %613 = vmatpush1.bf16.msra.mxu0 0
      %614 = vmatprep.subr.bf16.mxu0 0
      %615 = vmatpush1.bf16.msra.mxu0 0
      %616 = vmatprep.subr.bf16.mxu0 0
      %617 = vmatpush1.bf16.msra.mxu0 0
      %618 = vmatprep.subr.bf16.mxu0 0
      %619 = vmatpush1.bf16.msra.mxu0 0
      %620 = vmatprep.mubr.bf16.mxu0 0
      %621 = vmatmul.mubr.bf16.gmra.mrb[0].mxu0 %v568
      %v622 = vpop.f32.mrb[0].mxu0
      %v623 = vadd.f32 0.0, %v622
      %v624 = vpop.f32.mrb[0].mxu0
      %v625 = vpop.f32.mrb[0].mxu0
      %v626 = vadd.f32 0.0, %v625
      %v627 = vpop.f32.mrb[0].mxu0
      %628 = vmatprep.mubr.bf16.mxu0 0
      %629 = vmatmul.mubr.bf16.gmra.mrb[0].mxu0 %v570
      %v630 = vpop.f32.mrb[0].mxu0
      %v631 = vadd.f32 0.0, %v630
      %v632 = vpop.f32.mrb[0].mxu0
      %v633 = vpop.f32.mrb[0].mxu0
      %v634 = vadd.f32 0.0, %v633
      %v635 = vpop.f32.mrb[0].mxu0
      %636 = vmatprep.mubr.bf16.mxu0 0
      %637 = vmatmul.mubr.bf16.gmra.mrb[0].mxu0 %v572
      %v638 = vpop.f32.mrb[0].mxu0
      %v639 = vadd.f32 0.0, %v638
      %v640 = vpop.f32.mrb[0].mxu0
      %v641 = vpop.f32.mrb[0].mxu0
      %v642 = vadd.f32 0.0, %v641
      %v643 = vpop.f32.mrb[0].mxu0
      %644 = vmatprep.mubr.bf16.mxu0 0
      %645 = vmatmul.mubr.bf16.gmra.mrb[0].mxu0 %v574
      %v646 = vpop.f32.mrb[0].mxu0
      %v647 = vadd.f32 0.0, %v646
      %v648 = vpop.f32.mrb[0].mxu0
      %v649 = vpop.f32.mrb[0].mxu0
      %v650 = vadd.f32 0.0, %v649
      %v651 = vpop.f32.mrb[0].mxu0
      %652 = vmatprep.mubr.bf16.mxu0 0
      %653 = vmatmul.mubr.bf16.gmra.mrb[0].mxu0 %v576
      %v654 = vpop.f32.mrb[0].mxu0
      %v655 = vadd.f32 0.0, %v654
      %v656 = vpop.f32.mrb[0].mxu0
      %v657 = vpop.f32.mrb[0].mxu0
      %v658 = vadd.f32 0.0, %v657
      %v659 = vpop.f32.mrb[0].mxu0
      %660 = vmatprep.mubr.bf16.mxu0 0
      %661 = vmatmul.mubr.bf16.gmra.mrb[0].mxu0 %v578
      %v662 = vpop.f32.mrb[0].mxu0
      %v663 = vadd.f32 0.0, %v662
      %v664 = vpop.f32.mrb[0].mxu0
      %v665 = vpop.f32.mrb[0].mxu0
      %v666 = vadd.f32 0.0, %v665
      %v667 = vpop.f32.mrb[0].mxu0
      %668 = vmatprep.mubr.bf16.mxu0 0
      %669 = vmatmul.mubr.bf16.gmra.mrb[0].mxu0 %v580
      %v670 = vpop.f32.mrb[0].mxu0
      %v671 = vadd.f32 0.0, %v670
      %v672 = vpop.f32.mrb[0].mxu0
      %v673 = vpop.f32.mrb[0].mxu0
      %v674 = vadd.f32 0.0, %v673
      %v675 = vpop.f32.mrb[0].mxu0
      %676 = vmatprep.mubr.bf16.mxu0 0
      %677 = vmatmul.mubr.bf16.gmra.mrb[0].mxu0 %v582
      %v678 = vpop.f32.mrb[0].mxu0
      %v679 = vadd.f32 0.0, %v678
      %v680 = vpop.f32.mrb[0].mxu0
      %v681 = vpop.f32.mrb[0].mxu0
      %v682 = vadd.f32 0.0, %v681
      %v683 = vpop.f32.mrb[0].mxu0
      %684 = vdwg.mxu0
      %v688 = vunpack.c.l.b16 %v520
      %v689 = vunpack.c.l.b16 %v521
      %v690 = vunpack.c.l.b16 %v522
      %v691 = vpack.c.b16 %v689, %v688
      %v692 = vpack.c.b16 %v690, %v690
      %v694 = vsel %vm567, %v505, 0
      %v697 = vsel %vm584, %v692, 0
      %699 = vmatprep.subr.bf16.mxu0 0
      %700 = vmatpush1.bf16.msra.mxu0 %v691
      %701 = vmatprep.subr.bf16.mxu0 0
      %702 = vmatpush1.bf16.msra.mxu0 %v697
      %703 = vmatprep.subr.bf16.mxu0 0
      %704 = vmatpush1.bf16.msra.mxu0 0
      %705 = vmatprep.subr.bf16.mxu0 0
      %706 = vmatpush1.bf16.msra.mxu0 0
      %707 = vmatprep.subr.bf16.mxu0 0
      %708 = vmatpush1.bf16.msra.mxu0 0
      %709 = vmatprep.subr.bf16.mxu0 0
      %710 = vmatpush1.bf16.msra.mxu0 0
      %711 = vmatprep.subr.bf16.mxu0 0
      %712 = vmatpush1.bf16.msra.mxu0 0
      %713 = vmatprep.subr.bf16.mxu0 0
      %714 = vmatpush1.bf16.msra.mxu0 0
      %715 = vmatprep.subr.bf16.mxu0 0
      %716 = vmatpush1.bf16.msra.mxu0 0
      %717 = vmatprep.subr.bf16.mxu0 0
      %718 = vmatpush1.bf16.msra.mxu0 0
      %719 = vmatprep.subr.bf16.mxu0 0
      %720 = vmatpush1.bf16.msra.mxu0 0
      %721 = vmatprep.subr.bf16.mxu0 0
      %722 = vmatpush1.bf16.msra.mxu0 0
      %723 = vmatprep.subr.bf16.mxu0 0
      %724 = vmatpush1.bf16.msra.mxu0 0
      %725 = vmatprep.subr.bf16.mxu0 0
      %726 = vmatpush1.bf16.msra.mxu0 0
      %727 = vmatprep.subr.bf16.mxu0 0
      %728 = vmatpush1.bf16.msra.mxu0 0
      %729 = vmatprep.subr.bf16.mxu0 0
      %730 = vmatpush1.bf16.msra.mxu0 0
      %731 = vmatprep.mubr.bf16.mxu0 0
      %732 = vmatmul.mubr.bf16.gmra.mrb[0].mxu0 %v694
      %v733 = vpop.f32.mrb[0].mxu0
      %v734 = vadd.f32 %v623, %v733
      %v735 = vpop.f32.mrb[0].mxu0
      %v736 = vpop.f32.mrb[0].mxu0
      %v737 = vadd.f32 %v626, %v736
      %v738 = vpop.f32.mrb[0].mxu0
      %739 = vmatprep.mubr.bf16.mxu0 0
      %740 = vmatmul.mubr.bf16.gmra.mrb[0].mxu0 %v568
      %v741 = vpop.f32.mrb[0].mxu0
      %v742 = vadd.f32 %v631, %v741
      %v743 = vpop.f32.mrb[0].mxu0
      %v744 = vpop.f32.mrb[0].mxu0
      %v745 = vadd.f32 %v634, %v744
      %v746 = vpop.f32.mrb[0].mxu0
      %747 = vmatprep.mubr.bf16.mxu0 0
      %748 = vmatmul.mubr.bf16.gmra.mrb[0].mxu0 %v570
      %v749 = vpop.f32.mrb[0].mxu0
      %v750 = vadd.f32 %v639, %v749
      %v751 = vpop.f32.mrb[0].mxu0
      %v752 = vpop.f32.mrb[0].mxu0
      %v753 = vadd.f32 %v642, %v752
      %v754 = vpop.f32.mrb[0].mxu0
      %755 = vmatprep.mubr.bf16.mxu0 0
      %756 = vmatmul.mubr.bf16.gmra.mrb[0].mxu0 %v572
      %v757 = vpop.f32.mrb[0].mxu0
      %v758 = vadd.f32 %v647, %v757
      %v759 = vpop.f32.mrb[0].mxu0
      %v760 = vpop.f32.mrb[0].mxu0
      %v761 = vadd.f32 %v650, %v760
      %v762 = vpop.f32.mrb[0].mxu0
      %763 = vmatprep.mubr.bf16.mxu0 0
      %764 = vmatmul.mubr.bf16.gmra.mrb[0].mxu0 %v574
      %v765 = vpop.f32.mrb[0].mxu0
      %v766 = vadd.f32 %v655, %v765
      %v767 = vpop.f32.mrb[0].mxu0
      %v768 = vpop.f32.mrb[0].mxu0
      %v769 = vadd.f32 %v658, %v768
      %v770 = vpop.f32.mrb[0].mxu0
      %771 = vmatprep.mubr.bf16.mxu0 0
      %772 = vmatmul.mubr.bf16.gmra.mrb[0].mxu0 %v576
      %v773 = vpop.f32.mrb[0].mxu0
      %v774 = vadd.f32 %v663, %v773
      %v775 = vpop.f32.mrb[0].mxu0
      %v776 = vpop.f32.mrb[0].mxu0
      %v777 = vadd.f32 %v666, %v776
      %v778 = vpop.f32.mrb[0].mxu0
      %779 = vmatprep.mubr.bf16.mxu0 0
      %780 = vmatmul.mubr.bf16.gmra.mrb[0].mxu0 %v578
      %v781 = vpop.f32.mrb[0].mxu0
      %v782 = vadd.f32 %v671, %v781
      %v783 = vpop.f32.mrb[0].mxu0
      %v784 = vpop.f32.mrb[0].mxu0
      %v785 = vadd.f32 %v674, %v784
      %v786 = vpop.f32.mrb[0].mxu0
      %787 = vmatprep.mubr.bf16.mxu0 0
      %788 = vmatmul.mubr.bf16.gmra.mrb[0].mxu0 %v580
      %v789 = vpop.f32.mrb[0].mxu0
      %v790 = vadd.f32 %v679, %v789
      %v791 = vpop.f32.mrb[0].mxu0
      %v792 = vpop.f32.mrb[0].mxu0
      %v793 = vadd.f32 %v682, %v792
      %v794 = vpop.f32.mrb[0].mxu0
      %795 = vdwg.mxu0
      %v798 = vunpack.c.l.b16 %v265
      %v799 = vunpack.c.l.b16 %v266
      %v800 = vpack.c.b16 %v799, %v798
      %v802 = vunpack.c.l.b16 %v267
      %v803 = vpack.c.b16 %v802, %v802
      %v805 = vshrl.u32 %v800, 16
      %v807 = vshll.u32 %v800, 16
      %v809 = vrot.slane %v807, 1
      %v810 = vor.u32 %v805, %v809
      %v812 = vshll.u32 %v803, 16
      %v814 = vrot.slane %v812, 1
      %v815 = vsel %vm332, %v810, %v814
      %816 = vrot.lane.b32.xlu0 %v815, 8
      %v817 = vpop.permute.xlu0 %816
      %v818 = vrot.slane %v800, 1
      %v819 = vrot.slane %v803, 1
      %v820 = vsel %vm445, %v818, %v819
      %821 = vrot.lane.b32.xlu0 %v820, 16
      %v822 = vpop.permute.xlu0 %821
      %v824 = vsel %vm486, %v800, %v817
      %v826 = vsel %vm503, %v824, %v822
      %s827 = scalar_lea.vmem %s1, 24
      %v828 = vld [vmem:[%s827] sm:$0xf]
      %v829 = vld [vmem:[%s827 + $0x4] sm:$0xf]
      %v830 = vld [vmem:[%s827 + $0x8] sm:$0xf]
      %v834 = vunpack.c.l.b16 %v828
      %v835 = vunpack.c.l.b16 %v829
      %v836 = vunpack.c.l.b16 %v830
      %v837 = vpack.c.b16 %v835, %v834
      %v838 = vpack.c.b16 %v836, %v836
      %v840 = vsel %vm567, %v826, 0
      %v843 = vsel %vm584, %v838, 0
      %845 = vmatprep.subr.bf16.mxu0 0
      %846 = vmatpush1.bf16.msra.mxu0 %v837
      %847 = vmatprep.subr.bf16.mxu0 0
      %848 = vmatpush1.bf16.msra.mxu0 %v843
      %849 = vmatprep.subr.bf16.mxu0 0
      %850 = vmatpush1.bf16.msra.mxu0 0
      %851 = vmatprep.subr.bf16.mxu0 0
      %852 = vmatpush1.bf16.msra.mxu0 0
      %853 = vmatprep.subr.bf16.mxu0 0
      %854 = vmatpush1.bf16.msra.mxu0 0
      %855 = vmatprep.subr.bf16.mxu0 0
      %856 = vmatpush1.bf16.msra.mxu0 0
      %857 = vmatprep.subr.bf16.mxu0 0
      %858 = vmatpush1.bf16.msra.mxu0 0
      %859 = vmatprep.subr.bf16.mxu0 0
      %860 = vmatpush1.bf16.msra.mxu0 0
      %861 = vmatprep.subr.bf16.mxu0 0
      %862 = vmatpush1.bf16.msra.mxu0 0
      %863 = vmatprep.subr.bf16.mxu0 0
      %864 = vmatpush1.bf16.msra.mxu0 0
      %865 = vmatprep.subr.bf16.mxu0 0
      %866 = vmatpush1.bf16.msra.mxu0 0
      %867 = vmatprep.subr.bf16.mxu0 0
      %868 = vmatpush1.bf16.msra.mxu0 0
      %869 = vmatprep.subr.bf16.mxu0 0
      %870 = vmatpush1.bf16.msra.mxu0 0
      %871 = vmatprep.subr.bf16.mxu0 0
      %872 = vmatpush1.bf16.msra.mxu0 0
      %873 = vmatprep.subr.bf16.mxu0 0
      %874 = vmatpush1.bf16.msra.mxu0 0
      %875 = vmatprep.subr.bf16.mxu0 0
      %876 = vmatpush1.bf16.msra.mxu0 0
      %877 = vmatprep.mubr.bf16.mxu0 0
      %878 = vmatmul.mubr.bf16.gmra.mrb[0].mxu0 %v570
      %v879 = vpop.f32.mrb[0].mxu0
      %v880 = vadd.f32 0.0, %v879
      %v881 = vpop.f32.mrb[0].mxu0
      %v882 = vpop.f32.mrb[0].mxu0
      %v883 = vadd.f32 0.0, %v882
      %v884 = vpop.f32.mrb[0].mxu0
      %885 = vmatprep.mubr.bf16.mxu0 0
      %886 = vmatmul.mubr.bf16.gmra.mrb[0].mxu0 %v572
      %v887 = vpop.f32.mrb[0].mxu0
      %v888 = vadd.f32 0.0, %v887
      %v889 = vpop.f32.mrb[0].mxu0
      %v890 = vpop.f32.mrb[0].mxu0
      %v891 = vadd.f32 0.0, %v890
      %v892 = vpop.f32.mrb[0].mxu0
      %893 = vmatprep.mubr.bf16.mxu0 0
      %894 = vmatmul.mubr.bf16.gmra.mrb[0].mxu0 %v574
      %v895 = vpop.f32.mrb[0].mxu0
      %v896 = vadd.f32 0.0, %v895
      %v897 = vpop.f32.mrb[0].mxu0
      %v898 = vpop.f32.mrb[0].mxu0
      %v899 = vadd.f32 0.0, %v898
      %v900 = vpop.f32.mrb[0].mxu0
      %901 = vmatprep.mubr.bf16.mxu0 0
      %902 = vmatmul.mubr.bf16.gmra.mrb[0].mxu0 %v576
      %v903 = vpop.f32.mrb[0].mxu0
      %v904 = vadd.f32 0.0, %v903
      %v905 = vpop.f32.mrb[0].mxu0
      %v906 = vpop.f32.mrb[0].mxu0
      %v907 = vadd.f32 0.0, %v906
      %v908 = vpop.f32.mrb[0].mxu0
      %909 = vmatprep.mubr.bf16.mxu0 0
      %910 = vmatmul.mubr.bf16.gmra.mrb[0].mxu0 %v578
      %v911 = vpop.f32.mrb[0].mxu0
      %v912 = vadd.f32 0.0, %v911
      %v913 = vpop.f32.mrb[0].mxu0
      %v914 = vpop.f32.mrb[0].mxu0
      %v915 = vadd.f32 0.0, %v914
      %v916 = vpop.f32.mrb[0].mxu0
      %917 = vmatprep.mubr.bf16.mxu0 0
      %918 = vmatmul.mubr.bf16.gmra.mrb[0].mxu0 %v580
      %v919 = vpop.f32.mrb[0].mxu0
      %v920 = vadd.f32 0.0, %v919
      %v921 = vpop.f32.mrb[0].mxu0
      %v922 = vpop.f32.mrb[0].mxu0
      %v923 = vadd.f32 0.0, %v922
      %v924 = vpop.f32.mrb[0].mxu0
      %925 = vmatprep.mubr.bf16.mxu0 0
      %926 = vmatmul.mubr.bf16.gmra.mrb[0].mxu0 %v582
      %v927 = vpop.f32.mrb[0].mxu0
      %v928 = vadd.f32 0.0, %v927
      %v929 = vpop.f32.mrb[0].mxu0
      %v930 = vpop.f32.mrb[0].mxu0
      %v931 = vadd.f32 0.0, %v930
      %v932 = vpop.f32.mrb[0].mxu0
      %933 = vmatprep.mubr.bf16.mxu0 0
      %934 = vmatmul.mubr.bf16.gmra.mrb[0].mxu0 %v840
      %v935 = vpop.f32.mrb[0].mxu0
      %v936 = vadd.f32 0.0, %v935
      %v937 = vpop.f32.mrb[0].mxu0
      %v938 = vpop.f32.mrb[0].mxu0
      %v939 = vadd.f32 0.0, %v938
      %v940 = vpop.f32.mrb[0].mxu0
      %941 = vdwg.mxu0
      %v942 = vadd.f32 %v734, %v880
      %v943 = vadd.f32 %v737, %v883
      %v944 = vadd.f32 %v742, %v888
      %v945 = vadd.f32 %v745, %v891
      %v946 = vadd.f32 %v750, %v896
      %v947 = vadd.f32 %v753, %v899
      %v948 = vadd.f32 %v758, %v904
      %v949 = vadd.f32 %v761, %v907
      %v950 = vadd.f32 %v766, %v912
      %v951 = vadd.f32 %v769, %v915
      %v952 = vadd.f32 %v774, %v920
      %v953 = vadd.f32 %v777, %v923
      %v954 = vadd.f32 %v782, %v928
      %v955 = vadd.f32 %v785, %v931
      %v956 = vadd.f32 %v790, %v936
      %v957 = vadd.f32 %v793, %v939
      %v958 = vld [vmem:[%s2] sm:$0x1]
      %v960 = vlaneseq
      %v961 = vshrl.u32 %v960, 7
      %v962 = vsub.s32 0, %v961
      %v963 = vrot.slane %v958, %v962
      %v965 = vmul.f32 %v942, %v963
      %v966 = vmul.f32 %v943, %v963
      %v967 = vmul.f32 %v944, %v963
      %v968 = vmul.f32 %v945, %v963
      %v969 = vmul.f32 %v946, %v963
      %v970 = vmul.f32 %v947, %v963
      %v971 = vmul.f32 %v948, %v963
      %v972 = vmul.f32 %v949, %v963
      %v973 = vmul.f32 %v950, %v963
      %v974 = vmul.f32 %v951, %v963
      %v975 = vmul.f32 %v952, %v963
      %v976 = vmul.f32 %v953, %v963
      %v977 = vmul.f32 %v954, %v963
      %v978 = vmul.f32 %v955, %v963
      %v979 = vmul.f32 %v956, %v963
      %v980 = vmul.f32 %v957, %v963
      %v981 = vld [vmem:[%s3] sm:$0x1]
      %v983 = vlaneseq
      %v984 = vshrl.u32 %v983, 7
      %v985 = vsub.s32 0, %v984
      %v986 = vrot.slane %v981, %v985
      %v988 = vadd.f32 %v965, %v986
      %v989 = vadd.f32 %v966, %v986
      %v990 = vadd.f32 %v967, %v986
      %v991 = vadd.f32 %v968, %v986
      %v992 = vadd.f32 %v969, %v986
      %v993 = vadd.f32 %v970, %v986
      %v994 = vadd.f32 %v971, %v986
      %v995 = vadd.f32 %v972, %v986
      %v996 = vadd.f32 %v973, %v986
      %v997 = vadd.f32 %v974, %v986
      %v998 = vadd.f32 %v975, %v986
      %v999 = vadd.f32 %v976, %v986
      %v1000 = vadd.f32 %v977, %v986
      %v1001 = vadd.f32 %v978, %v986
      %v1002 = vadd.f32 %v979, %v986
      %v1003 = vadd.f32 %v980, %v986
      %v1004 = vmax.f32 %v988, 0.0
      %v1005 = vmax.f32 %v989, 0.0
      %v1006 = vmax.f32 %v990, 0.0
      %v1007 = vmax.f32 %v991, 0.0
      %v1008 = vmax.f32 %v992, 0.0
      %v1009 = vmax.f32 %v993, 0.0
      %v1010 = vmax.f32 %v994, 0.0
      %v1011 = vmax.f32 %v995, 0.0
      %v1012 = vmax.f32 %v996, 0.0
      %v1013 = vmax.f32 %v997, 0.0
      %v1014 = vmax.f32 %v998, 0.0
      %v1015 = vmax.f32 %v999, 0.0
      %v1016 = vmax.f32 %v1000, 0.0
      %v1017 = vmax.f32 %v1001, 0.0
      %v1018 = vmax.f32 %v1002, 0.0
      %v1019 = vmax.f32 %v1003, 0.0
      %1020 = vst [vmem:[%s235] sm:$0xff] %v1004
      %1021 = vst [vmem:[%s235 + $0x8] sm:$0xff] %v1005
      %1022 = vst [vmem:[%s235 + $0x10] sm:$0xff] %v1006
      %1023 = vst [vmem:[%s235 + $0x18] sm:$0xff] %v1007
      %1024 = vst [vmem:[%s235 + $0x20] sm:$0xff] %v1008
      %1025 = vst [vmem:[%s235 + $0x28] sm:$0xff] %v1009
      %1026 = vst [vmem:[%s235 + $0x30] sm:$0xff] %v1010
      %1027 = vst [vmem:[%s235 + $0x38] sm:$0xff] %v1011
      %1028 = vst [vmem:[%s235 + $0x40] sm:$0xff] %v1012
      %1029 = vst [vmem:[%s235 + $0x48] sm:$0xff] %v1013
      %1030 = vst [vmem:[%s235 + $0x50] sm:$0xff] %v1014
      %1031 = vst [vmem:[%s235 + $0x58] sm:$0xff] %v1015
      %1032 = vst [vmem:[%s235 + $0x60] sm:$0xff] %v1016
      %1033 = vst [vmem:[%s235 + $0x68] sm:$0xff] %v1017
      %1034 = vst [vmem:[%s235 + $0x70] sm:$0xff] %v1018
      %1035 = vst [vmem:[%s235 + $0x78] sm:$0xff] %v1019
      %s1036 = smul.u32 8, %s20
      %p1037 = scmp.lt.s32.totalorder %s19, 1
      %s1038 = scalar_select %p1037, %s19, 1
      %p1039 = scmp.lt.s32.totalorder %s1036, 15
      %s1040 = scalar_select %p1039, %s1036, 15
      %s1041 = smul.addr %s1040, 2
      %s1042 = smul.addr %s1038, 32
      %s1043 = sadd.s32 %s1041, %s1042
      %s1044 = smul.addr %s1043, 8
      %s1045 = scalar_lea.vmem %s4, %s1044
      // Predicated region
      $region37: #{conv3x3_block_x1.1} parent=35 // pred_check
        %p1046 = pneg %p138
      $region38: #{conv3x3_block_x1.1} parent=35 // pred_check_branch
        %1048 = sbr.rel (%p1046) target = $region40
      $region39: #{conv3x3_block_x1.1} parent=35 // pred_region
        %s1049 = smul.u32 8, %s20
      $region40: #{conv3x3_block_x1.1} parent=35 // pred_fallthru
        _
    $region36: #{conv3x3_block_x1.1} parent=5 // pred_fallthru
      _
    %p1050 = scmp.le.s32.totalorder 2, %s10
    // Predicated region
    $region41: #{conv3x3_block_x1.1} parent=5 // pred_check
      %p1051 = pneg %p1050
    $region42: #{conv3x3_block_x1.1} parent=5 // pred_check_branch
      %1053 = sbr.rel (%p1051) target = $region44
    $region43: #{conv3x3_block_x1.1} parent=5 // pred_region
      %s1054 = ssub.s32 %s10, 2
      // Predicated region
      $region45: #{conv3x3_block_x1.1} parent=43 // pred_check
        %p1055 = pneg %p144
      $region46: #{conv3x3_block_x1.1} parent=43 // pred_check_branch
        %1057 = sbr.rel (%p1055) target = $region48
      $region47: #{conv3x3_block_x1.1} parent=43 // pred_region
        %s1058 = smul.u32 8, %s22
        %p1059 = scmp.lt.s32.totalorder %s21, 1
        %s1060 = scalar_select %p1059, %s21, 1
        %p1061 = scmp.lt.s32.totalorder %s1058, 15
        %s1062 = scalar_select %p1061, %s1058, 15
        %s1063 = smul.addr %s1062, 2
        %s1064 = smul.addr %s1060, 32
        %s1065 = sadd.s32 %s1063, %s1064
        %s1066 = smul.addr %s1065, 8
        %s1067 = scalar_lea.vmem %s4, %s1066
      $region48: #{conv3x3_block_x1.1} parent=43 // pred_fallthru
        _
    $region44: #{conv3x3_block_x1.1} parent=5 // pred_fallthru
      _
  $region6: #{conv3x3_block_x1.1} parent=0 // loop_footer
    %s14 = sadd.s32 1, %s10
  $region7: #{conv3x3_block_x1.1} parent=0 // loop_footer_branch
    %9 = sbr.rel target = $region3
  $region8: #{conv3x3_block_x1.1} parent=0 // loop_exit
    _

</llo_original>
